<compile_context>
chip_gen: v7x
topology: tpu7x:2x2x1
jax: 0.10.0
libtpu: 0.0.40
codegen_flags: <defaults>
</compile_context>

<pallas_src>
import jax
import jax.numpy as jnp
from jax.experimental import pallas as pl
from jax.experimental.pallas import tpu as pltpu


def _ceil_to(a, b):
    return -(-a // b) * b


def _pick_batch_block(B, per_elem_bytes, budget_bytes, max_bt=8):
    """Largest divisor of B whose block fits the VMEM data budget, keeping >= 2
    grid steps (so both v7x TensorCores get work) whenever B >= 2."""
    best = 1
    for d in range(1, min(B, max_bt) + 1):
        if B % d:
            continue
        if B >= 2 and (B // d) < 2:
            continue
        if d * per_elem_bytes <= budget_bytes:
            best = d
    return best


def _make_sepconv_kernel(k, Cin, W, Ho, stride, Bt, mxu_dtype):
    Wc = W * Cin  # folded (width x channel) lane extent of the depthwise stage

    def kernel(x_ref, dw_ref, b1_ref, pw_ref, b2_ref, o_ref):
        # x_ref : (Bt, Hp, Wp*Cin)   padded input, W folded into the lane axis
        # dw_ref: (k*k, W*Cin)       BN1-folded depthwise weights, tiled over W
        # b1_ref: (1, W*Cin)         BN1-folded bias, tiled over W
        # pw_ref: (W*Cin, Wo*Cout)   BN2-folded 1x1 weights, block-diagonal and
        #                            stride-selecting in W, pre-cast to mxu dtype
        # b2_ref: (1, Wo*Cout)       BN2-folded bias, tiled over Wo
        # o_ref : (Bt, Ho, Wo*Cout)
        dw = dw_ref[...].astype(jnp.float32)
        bias1 = b1_ref[...].astype(jnp.float32)
        bias2 = b2_ref[...].astype(jnp.float32)

        h1_blocks = []
        for b in range(Bt):
            acc = jnp.zeros((Ho, Wc), jnp.float32)
            for kh in range(k):
                # One row band per (b, kh): a single f32 cast instead of one per
                # tap (v5e VPU has no bf16 path).  H-stride handled right here.
                if stride == 1:
                    band = x_ref[b, kh:kh + Ho, :]
                else:
                    band = x_ref[b, pl.ds(kh, Ho, stride), :]
                band = band.astype(jnp.float32)
                for kw in range(k):
                    # kw shift == static lane shift by kw*Cin in the folded layout.
                    tap = band[:, kw * Cin:kw * Cin + Wc]
                    acc = acc + tap * dw[kh * k + kw:kh * k + kw + 1, :]
            # BN1 (folded) + ReLU.
            h1_blocks.append(jnp.maximum(acc + bias1, 0.0))

        h1 = h1_blocks[0] if Bt == 1 else jnp.concatenate(h1_blocks, axis=0)

        # Pointwise 1x1 conv: one lane-dense MXU matmul (f32 accumulation); the
        # block-diagonal weight also applies the W-stride selection.
        y = jnp.dot(h1.astype(mxu_dtype), pw_ref[...],
                    preferred_element_type=jnp.float32)
        y = jnp.maximum(y + bias2, 0.0).astype(o_ref.dtype)   # BN2 (folded) + ReLU

        for b in range(Bt):
            o_ref[b] = y[b * Ho:(b + 1) * Ho, :]

    return kernel


def separable_conv(x, dw_weight, bn1_params, pw_weight, bn2_params,
                   *, stride=1, eps=1e-5, use_bf16_mxu=True):
    """x: (B, Cin, H, W) NCHW; dw_weight: (Cin, 1, k, k); pw_weight: (Cout, Cin, 1, 1);
    bn*_params: (gamma, beta, running_mean, running_var)."""
    assert stride in (1, 2), "stride should be in [1, 2]"
    B, Cin, H, W = x.shape
    Cout = pw_weight.shape[0]
    k = dw_weight.shape[-1]
    assert k % 2 == 1, "odd kernel expected (pad = k // 2)"
    pad = k // 2
    Hp, Wp = H + 2 * pad, W + 2 * pad
    Ho = (H + 2 * pad - k) // stride + 1
    Wo = (W + 2 * pad - k) // stride + 1

    g1, b1, m1, v1 = bn1_params
    g2, b2, m2, v2 = bn2_params
    mxu_dtype = jnp.bfloat16 if use_bf16_mxu else jnp.float32

    # ---- Fold inference-mode BatchNorm into conv weights / biases (wrapper). ----
    # TODO(synk): training-mode BatchNorm (per-batch statistics) is not computed in-kernel.
    s1 = g1 / jnp.sqrt(v1 + eps)                                    # (Cin,)
    dw_f = (dw_weight.reshape(Cin, k * k) * s1[:, None]).T          # (k*k, Cin)
    dw_tiled = jnp.tile(dw_f, (1, W))                               # (k*k, W*Cin)
    bias1_t = jnp.tile((b1 - m1 * s1).reshape(1, Cin), (1, W))      # (1, W*Cin)

    s2 = g2 / jnp.sqrt(v2 + eps)                                    # (Cout,)
    pw_f = (pw_weight.reshape(Cout, Cin) * s2[:, None]).T           # (Cin, Cout)
    # Block-diagonal, stride-selecting pointwise weight in the folded layout:
    #   pw_big[w*Cin + c, wo*Cout + j] = pw_f[c, j] iff w == stride*wo.
    sel = (jnp.arange(W)[:, None] == stride * jnp.arange(Wo)[None, :])
    pw_big = jnp.kron(sel.astype(pw_f.dtype), pw_f).astype(mxu_dtype)  # (W*Cin, Wo*Cout)
    bias2_t = jnp.tile((b2 - m2 * s2).reshape(1, Cout), (1, Wo))    # (1, Wo*Cout)

    # ---- NCHW -> NHWC -> zero-pad -> fold W into the lane axis. ----
    x_nhwc = jnp.transpose(x, (0, 2, 3, 1))
    x_pad = jnp.pad(x_nhwc, ((0, 0), (pad, pad), (pad, pad), (0, 0)))
    x_fold = x_pad.reshape(B, Hp, Wp * Cin)

    # ---- Batch-block size + VMEM budget (v7x has only 64 MiB per TensorCore). ----
    itemsize = x.dtype.itemsize
    lane_in, sub_in = _ceil_to(Wp * Cin, 128), _ceil_to(Hp, 8)
    lane_mid = _ceil_to(W * Cin, 128)
    lane_out, sub_out = _ceil_to(Wo * Cout, 128), _ceil_to(Ho, 8)
    in_elem = sub_in * lane_in * itemsize
    out_elem = sub_out * lane_out * itemsize
    tmp_elem = (4 * sub_out * lane_mid + sub_out * lane_out) * 4    # acc/band/h1/y (f32)
    per_elem = 2 * (in_elem + out_elem) + tmp_elem                  # x2: double-buffered DMA
    Bt = _pick_batch_block(B, per_elem, budget_bytes=12 * 1024 * 1024)
    nb = B // Bt

    w_bytes = (_ceil_to(k * k, 8) * lane_mid + 8 * lane_mid + 8 * lane_out) * 4 \
        + _ceil_to(W * Cin, 8) * lane_out * pw_big.dtype.itemsize
    vmem_est = Bt * per_elem + 2 * w_bytes + 4 * 1024 * 1024
    vmem_limit = int(min(48 * 1024 * 1024, max(vmem_est, 16 * 1024 * 1024)))

    # TODO(synk): for the largest PFLD layers (H,W ~ 112, Cin ~ 128) add a halo-tiled
    # H grid axis so the f32 temporaries stay bounded; unnecessary at these sizes.

    flops = 2 * B * Ho * W * Cin * k * k + 2 * B * Ho * (W * Cin) * (Wo * Cout)
    bytes_accessed = int((x_fold.size + B * Ho * Wo * Cout) * itemsize
                         + (dw_tiled.size + bias1_t.size + bias2_t.size) * 4
                         + pw_big.size * pw_big.dtype.itemsize)

    kernel = _make_sepconv_kernel(k, Cin, W, Ho, stride, Bt, mxu_dtype)
    out_fold = pl.pallas_call(
        kernel,
        out_shape=jax.ShapeDtypeStruct((B, Ho, Wo * Cout), x.dtype),
        grid_spec=pltpu.PrefetchScalarGridSpec(
            num_scalar_prefetch=0,
            grid=(nb,),                                             # pipelined over batch blocks
            in_specs=[
                pl.BlockSpec((Bt, Hp, Wp * Cin), lambda i: (i, 0, 0)),
                pl.BlockSpec((k * k, W * Cin), lambda i: (0, 0)),   # weights stay VMEM-resident
                pl.BlockSpec((1, W * Cin), lambda i: (0, 0)),
                pl.BlockSpec((W * Cin, Wo * Cout), lambda i: (0, 0)),
                pl.BlockSpec((1, Wo * Cout), lambda i: (0, 0)),
            ],
            out_specs=pl.BlockSpec((Bt, Ho, Wo * Cout), lambda i: (i, 0, 0)),
        ),
        compiler_params=pltpu.CompilerParams(
            dimension_semantics=("parallel",),                      # megacore sharding on v7x
            vmem_limit_bytes=vmem_limit,
        ),
        cost_estimate=pl.CostEstimate(flops=flops, transcendentals=0,
                                      bytes_accessed=bytes_accessed),
    )(x_fold, dw_tiled, bias1_t, pw_big, bias2_t)

    out = out_fold.reshape(B, Ho, Wo, Cout)
    return jnp.transpose(out, (0, 3, 1, 2))                         # back to NCHW


def _reference(x, dw_weight, bn1_params, pw_weight, bn2_params, *, stride=1, eps=1e-5):
    """Pure-JAX reference of the PyTorch forward (inference-mode BN)."""
    B, Cin, H, W = x.shape
    k = dw_weight.shape[-1]
    pad = k // 2
    g1, b1, m1, v1 = bn1_params
    g2, b2, m2, v2 = bn2_params

    y = jax.lax.conv_general_dilated(
        x, dw_weight, window_strides=(stride, stride),
        padding=[(pad, pad), (pad, pad)],
        dimension_numbers=("NCHW", "OIHW", "NCHW"),
        feature_group_count=Cin)
    y = (y - m1[None, :, None, None]) * (g1 / jnp.sqrt(v1 + eps))[None, :, None, None] \
        + b1[None, :, None, None]
    y = jnp.maximum(y, 0.0)

    y = jax.lax.conv_general_dilated(
        y, pw_weight, window_strides=(1, 1), padding="VALID",
        dimension_numbers=("NCHW", "OIHW", "NCHW"))
    y = (y - m2[None, :, None, None]) * (g2 / jnp.sqrt(v2 + eps))[None, :, None, None] \
        + b2[None, :, None, None]
    return jnp.maximum(y, 0.0)


if __name__ == "__main__":
    B, Cin, Cout, H, W, k, stride = 2, 16, 32, 16, 16, 3, 1

    key = jax.random.PRNGKey(0)
    ks = jax.random.split(key, 11)
    x = jax.random.normal(ks[0], (B, Cin, H, W), jnp.float32)
    dw_w = 0.2 * jax.random.normal(ks[1], (Cin, 1, k, k), jnp.float32)
    pw_w = 0.2 * jax.random.normal(ks[2], (Cout, Cin, 1, 1), jnp.float32)
    g1 = 1.0 + 0.1 * jax.random.normal(ks[3], (Cin,), jnp.float32)
    b1 = 0.1 * jax.random.normal(ks[4], (Cin,), jnp.float32)
    m1 = 0.1 * jax.random.normal(ks[5], (Cin,), jnp.float32)
    v1 = jax.random.uniform(ks[6], (Cin,), jnp.float32, minval=0.5, maxval=1.5)
    g2 = 1.0 + 0.1 * jax.random.normal(ks[7], (Cout,), jnp.float32)
    b2 = 0.1 * jax.random.normal(ks[8], (Cout,), jnp.float32)
    m2 = 0.1 * jax.random.normal(ks[9], (Cout,), jnp.float32)
    v2 = jax.random.uniform(ks[10], (Cout,), jnp.float32, minval=0.5, maxval=1.5)

    bn1 = (g1, b1, m1, v1)
    bn2 = (g2, b2, m2, v2)
    ref = _reference(x, dw_w, bn1, pw_w, bn2, stride=stride)

    # Exact path (f32 MXU operands): must match the reference tightly.
    out_f32 = jax.block_until_ready(
        separable_conv(x, dw_w, bn1, pw_w, bn2, stride=stride, use_bf16_mxu=False))
    assert out_f32.shape == ref.shape, (out_f32.shape, ref.shape)
    assert jnp.allclose(out_f32, ref, atol=1e-4, rtol=1e-4), \
        float(jnp.max(jnp.abs(out_f32 - ref)))

    # Fast path (bf16 MXU operands, f32 accumulation): looser tolerance.
    out_bf16 = jax.block_until_ready(
        separable_conv(x, dw_w, bn1, pw_w, bn2, stride=stride, use_bf16_mxu=True))
    assert out_bf16.shape == ref.shape, (out_bf16.shape, ref.shape)
    assert jnp.allclose(out_bf16, ref, atol=5e-2, rtol=5e-2), \
        float(jnp.max(jnp.abs(out_bf16 - ref)))

    print("KERNEL_OK")
</pallas_src>

<mosaic_0001>
module attributes {stable_mosaic.version = 11 : i64} {
  func.func @kernel(%arg0: i32, %arg1: memref<1x18x288xf32, #tpu.memory_space<vmem>>, %arg2: memref<9x256xf32, #tpu.memory_space<vmem>>, %arg3: memref<1x256xf32, #tpu.memory_space<vmem>>, %arg4: memref<256x512xf32, #tpu.memory_space<vmem>>, %arg5: memref<1x512xf32, #tpu.memory_space<vmem>>, %arg6: memref<1x16x512xf32, #tpu.memory_space<vmem>>) attributes {dimension_semantics = [#tpu.dimension_semantics<parallel>], iteration_bounds = array<i64: 2>, scalar_prefetch = 0 : i64, scratch_operands = 0 : i64, tpu.core_type = #tpu.core_type<tc>, window_params = [{transform_indices = @transform_0, window_bounds = array<i64: 1, 18, 288>}, {pipeline_mode = #tpu.pipeline_mode<synchronous>, transform_indices = @transform_1, window_bounds = array<i64: 9, 256>}, {pipeline_mode = #tpu.pipeline_mode<synchronous>, transform_indices = @transform_2, window_bounds = array<i64: 1, 256>}, {pipeline_mode = #tpu.pipeline_mode<synchronous>, transform_indices = @transform_3, window_bounds = array<i64: 256, 512>}, {pipeline_mode = #tpu.pipeline_mode<synchronous>, transform_indices = @transform_4, window_bounds = array<i64: 1, 512>}, {transform_indices = @transform_5, window_bounds = array<i64: 1, 16, 512>}]} {
    %c0 = arith.constant 0 : index
    %c0_0 = arith.constant 0 : index
    %0 = vector.load %arg2[%c0, %c0_0] : memref<9x256xf32, #tpu.memory_space<vmem>>, vector<9x256xf32>
    %c0_1 = arith.constant 0 : index
    %c0_2 = arith.constant 0 : index
    %1 = vector.load %arg3[%c0_1, %c0_2] : memref<1x256xf32, #tpu.memory_space<vmem>>, vector<1x256xf32>
    %c0_3 = arith.constant 0 : index
    %c0_4 = arith.constant 0 : index
    %2 = vector.load %arg5[%c0_3, %c0_4] : memref<1x512xf32, #tpu.memory_space<vmem>>, vector<1x512xf32>
    %cst = arith.constant 0.000000e+00 : f32
    %3 = vector.broadcast %cst : f32 to vector<16x256xf32>
    %c0_5 = arith.constant 0 : index
    %c0_6 = arith.constant 0 : index
    %c0_7 = arith.constant 0 : index
    %4 = vector.load %arg1[%c0_5, %c0_6, %c0_7] : memref<1x18x288xf32, #tpu.memory_space<vmem>>, vector<1x16x288xf32>
    %5 = vector.shape_cast %4 : vector<1x16x288xf32> to vector<16x288xf32>
    %6 = vector.extract_strided_slice %5 {offsets = [0, 0], sizes = [16, 256], strides = [1, 1]} : vector<16x288xf32> to vector<16x256xf32>
    %7 = vector.extract_strided_slice %0 {offsets = [0, 0], sizes = [1, 256], strides = [1, 1]} : vector<9x256xf32> to vector<1x256xf32>
    %8 = vector.broadcast %7 : vector<1x256xf32> to vector<16x256xf32>
    %9 = arith.mulf %6, %8 : vector<16x256xf32>
    %10 = arith.addf %3, %9 : vector<16x256xf32>
    %11 = vector.extract_strided_slice %5 {offsets = [0, 16], sizes = [16, 256], strides = [1, 1]} : vector<16x288xf32> to vector<16x256xf32>
    %12 = vector.extract_strided_slice %0 {offsets = [1, 0], sizes = [1, 256], strides = [1, 1]} : vector<9x256xf32> to vector<1x256xf32>
    %13 = vector.broadcast %12 : vector<1x256xf32> to vector<16x256xf32>
    %14 = arith.mulf %11, %13 : vector<16x256xf32>
    %15 = arith.addf %10, %14 : vector<16x256xf32>
    %16 = vector.extract_strided_slice %5 {offsets = [0, 32], sizes = [16, 256], strides = [1, 1]} : vector<16x288xf32> to vector<16x256xf32>
    %17 = vector.extract_strided_slice %0 {offsets = [2, 0], sizes = [1, 256], strides = [1, 1]} : vector<9x256xf32> to vector<1x256xf32>
    %18 = vector.broadcast %17 : vector<1x256xf32> to vector<16x256xf32>
    %19 = arith.mulf %16, %18 : vector<16x256xf32>
    %20 = arith.addf %15, %19 : vector<16x256xf32>
    %c0_8 = arith.constant 0 : index
    %c1 = arith.constant 1 : index
    %c0_9 = arith.constant 0 : index
    %21 = vector.load %arg1[%c0_8, %c1, %c0_9] : memref<1x18x288xf32, #tpu.memory_space<vmem>>, vector<1x16x288xf32>
    %22 = vector.shape_cast %21 : vector<1x16x288xf32> to vector<16x288xf32>
    %23 = vector.extract_strided_slice %22 {offsets = [0, 0], sizes = [16, 256], strides = [1, 1]} : vector<16x288xf32> to vector<16x256xf32>
    %24 = vector.extract_strided_slice %0 {offsets = [3, 0], sizes = [1, 256], strides = [1, 1]} : vector<9x256xf32> to vector<1x256xf32>
    %25 = vector.broadcast %24 : vector<1x256xf32> to vector<16x256xf32>
    %26 = arith.mulf %23, %25 : vector<16x256xf32>
    %27 = arith.addf %20, %26 : vector<16x256xf32>
    %28 = vector.extract_strided_slice %22 {offsets = [0, 16], sizes = [16, 256], strides = [1, 1]} : vector<16x288xf32> to vector<16x256xf32>
    %29 = vector.extract_strided_slice %0 {offsets = [4, 0], sizes = [1, 256], strides = [1, 1]} : vector<9x256xf32> to vector<1x256xf32>
    %30 = vector.broadcast %29 : vector<1x256xf32> to vector<16x256xf32>
    %31 = arith.mulf %28, %30 : vector<16x256xf32>
    %32 = arith.addf %27, %31 : vector<16x256xf32>
    %33 = vector.extract_strided_slice %22 {offsets = [0, 32], sizes = [16, 256], strides = [1, 1]} : vector<16x288xf32> to vector<16x256xf32>
    %34 = vector.extract_strided_slice %0 {offsets = [5, 0], sizes = [1, 256], strides = [1, 1]} : vector<9x256xf32> to vector<1x256xf32>
    %35 = vector.broadcast %34 : vector<1x256xf32> to vector<16x256xf32>
    %36 = arith.mulf %33, %35 : vector<16x256xf32>
    %37 = arith.addf %32, %36 : vector<16x256xf32>
    %c0_10 = arith.constant 0 : index
    %c2 = arith.constant 2 : index
    %c0_11 = arith.constant 0 : index
    %38 = vector.load %arg1[%c0_10, %c2, %c0_11] : memref<1x18x288xf32, #tpu.memory_space<vmem>>, vector<1x16x288xf32>
    %39 = vector.shape_cast %38 : vector<1x16x288xf32> to vector<16x288xf32>
    %40 = vector.extract_strided_slice %39 {offsets = [0, 0], sizes = [16, 256], strides = [1, 1]} : vector<16x288xf32> to vector<16x256xf32>
    %41 = vector.extract_strided_slice %0 {offsets = [6, 0], sizes = [1, 256], strides = [1, 1]} : vector<9x256xf32> to vector<1x256xf32>
    %42 = vector.broadcast %41 : vector<1x256xf32> to vector<16x256xf32>
    %43 = arith.mulf %40, %42 : vector<16x256xf32>
    %44 = arith.addf %37, %43 : vector<16x256xf32>
    %45 = vector.extract_strided_slice %39 {offsets = [0, 16], sizes = [16, 256], strides = [1, 1]} : vector<16x288xf32> to vector<16x256xf32>
    %46 = vector.extract_strided_slice %0 {offsets = [7, 0], sizes = [1, 256], strides = [1, 1]} : vector<9x256xf32> to vector<1x256xf32>
    %47 = vector.broadcast %46 : vector<1x256xf32> to vector<16x256xf32>
    %48 = arith.mulf %45, %47 : vector<16x256xf32>
    %49 = arith.addf %44, %48 : vector<16x256xf32>
    %50 = vector.extract_strided_slice %39 {offsets = [0, 32], sizes = [16, 256], strides = [1, 1]} : vector<16x288xf32> to vector<16x256xf32>
    %51 = vector.extract_strided_slice %0 {offsets = [8, 0], sizes = [1, 256], strides = [1, 1]} : vector<9x256xf32> to vector<1x256xf32>
    %52 = vector.broadcast %51 : vector<1x256xf32> to vector<16x256xf32>
    %53 = arith.mulf %50, %52 : vector<16x256xf32>
    %54 = arith.addf %49, %53 : vector<16x256xf32>
    %55 = vector.broadcast %1 : vector<1x256xf32> to vector<16x256xf32>
    %56 = arith.addf %54, %55 : vector<16x256xf32>
    %cst_12 = arith.constant 0.000000e+00 : f32
    %57 = vector.broadcast %cst_12 : f32 to vector<16x256xf32>
    %58 = arith.maximumf %56, %57 : vector<16x256xf32>
    %c0_13 = arith.constant 0 : index
    %c0_14 = arith.constant 0 : index
    %59 = vector.load %arg4[%c0_13, %c0_14] : memref<256x512xf32, #tpu.memory_space<vmem>>, vector<256x512xf32>
    %cst_15 = arith.constant dense<0.000000e+00> : vector<16x512xf32>
    %60 = tpu.matmul %58, %59, %cst_15 {dimension_numbers = #tpu.dot_dimension_numbers<[1], [0], [0], [1], [0, 0, 1, 1], [], []>} : vector<16x256xf32>, vector<256x512xf32>, vector<16x512xf32> -> vector<16x512xf32>
    %61 = vector.broadcast %2 : vector<1x512xf32> to vector<16x512xf32>
    %62 = arith.addf %60, %61 : vector<16x512xf32>
    %cst_16 = arith.constant 0.000000e+00 : f32
    %63 = vector.broadcast %cst_16 : f32 to vector<16x512xf32>
    %64 = arith.maximumf %62, %63 : vector<16x512xf32>
    %c0_17 = arith.constant 0 : index
    %c0_18 = arith.constant 0 : index
    %c0_19 = arith.constant 0 : index
    %65 = vector.load %arg6[%c0_17, %c0_18, %c0_19] : memref<1x16x512xf32, #tpu.memory_space<vmem>>, vector<1x16x512xf32>
    %66 = vector.shape_cast %65 : vector<1x16x512xf32> to vector<16x512xf32>
    %67 = vector.shape_cast %64 : vector<16x512xf32> to vector<1x16x512xf32>
    tpu.vector_store %arg6[%c0_17, %c0_18, %c0_19], %67 {strides = array<i32>} : memref<1x16x512xf32, #tpu.memory_space<vmem>>, vector<1x16x512xf32>,
    return
  }
  func.func @transform_0(%arg0: i32) -> (i32, i32, i32) {
    %c0_i32 = arith.constant 0 : i32
    %c0_i32_0 = arith.constant 0 : i32
    %c0_i32_1 = arith.constant 0 : i32
    return %arg0, %c0_i32, %c0_i32_0 : i32, i32, i32
  }
  func.func @transform_1(%arg0: i32) -> (i32, i32) {
    %c0_i32 = arith.constant 0 : i32
    %c0_i32_0 = arith.constant 0 : i32
    %c0_i32_1 = arith.constant 0 : i32
    return %c0_i32, %c0_i32_0 : i32, i32
  }
  func.func @transform_2(%arg0: i32) -> (i32, i32) {
    %c0_i32 = arith.constant 0 : i32
    %c0_i32_0 = arith.constant 0 : i32
    %c0_i32_1 = arith.constant 0 : i32
    return %c0_i32, %c0_i32_0 : i32, i32
  }
  func.func @transform_3(%arg0: i32) -> (i32, i32) {
    %c0_i32 = arith.constant 0 : i32
    %c0_i32_0 = arith.constant 0 : i32
    %c0_i32_1 = arith.constant 0 : i32
    return %c0_i32, %c0_i32_0 : i32, i32
  }
  func.func @transform_4(%arg0: i32) -> (i32, i32) {
    %c0_i32 = arith.constant 0 : i32
    %c0_i32_0 = arith.constant 0 : i32
    %c0_i32_1 = arith.constant 0 : i32
    return %c0_i32, %c0_i32_0 : i32, i32
  }
  func.func @transform_5(%arg0: i32) -> (i32, i32, i32) {
    %c0_i32 = arith.constant 0 : i32
    %c0_i32_0 = arith.constant 0 : i32
    %c0_i32_1 = arith.constant 0 : i32
    return %arg0, %c0_i32, %c0_i32_0 : i32, i32, i32
  }
}

</mosaic_0001>

<llo_original>
// kernel: tpu_custom_call.1
$region0: #{tpu_custom_call.1}
  #allocation0 [shape = 'u32[]', space=smem, size = 0x4, offset = 0x4, fixed_abs, tag = 'smem constant byte address 0x4 - core index']
  #allocation1 [shape = 'u32[144,128]{1,0:T(1,128)}', space=vmem, size = 0x12000, scoped, tag = 'internal scratch']
  %s0 = inlined_call_operand.vmem [shape: f32[2,18,288], index: 0, kind: input, shape index: {}]
  %s1 = inlined_call_operand.vmem [shape: f32[9,256], index: 1, kind: input, shape index: {}]
  %s2 = inlined_call_operand.vmem [shape: f32[1,256], index: 2, kind: input, shape index: {}]
  %s3 = inlined_call_operand.hbm [shape: f32[256,512], index: 3, kind: input, shape index: {}]
  %s4 = inlined_call_operand.vmem [shape: f32[1,512], index: 4, kind: input, shape index: {}]
  %s5 = inlined_call_operand.hbm [shape: f32[2,16,512], index: 5, kind: output, shape index: {}]
  %s6 = sld [smem:[#allocation0]]
  $region57: #{tpu_custom_call.1} parent=0
    _
  %s8 = ssub.s32 1, %s6
  %s9 = scalar_select 0, %s8, %s6
  $region1: #{tpu_custom_call.1} parent=0
    #allocation2 [shape = 'u8[524288]{0}', space=vmem, size = 0x80000, scoped, tag = 'input window, operand 3, single buffered']
    #allocation3 [shape = 's32[2]{0}', space=sflag, size = 0x8, scoped, tag = 'scoped memory for tpu_custom_call.1']
    #allocation4 [shape = 's32[2]{0}', space=sflag, size = 0x8, scoped, tag = 'scoped memory for tpu_custom_call.1']
    #allocation5 [shape = 'u8[65536]{0}', space=vmem, size = 0x10000, scoped, tag = 'output window, operand 0']
    %10 = vsyncpa [#allocation3], 0
    %11 = vsyncpa [#allocation4], 0
    %s12 = scalar_lea.sflag [#allocation4], 1
    %13 = vsyncpa %s12, 0
    loop: start=0, step=1, limit=4
    $region2: #{tpu_custom_call.1} parent=1 // loop_pre_header
      _
    $region3: #{tpu_custom_call.1} parent=1 // loop_header
      %s15 = sphi 0, %s19
      %p16 = scmp.ge.s32.totalorder %s15, 4
      %s25 = sphi 0, %s27
      %s28 = sphi 0, %s25
      %s29 = sphi 0, %s28
      %s45 = sphi 0, %s29
      %s49 = sphi 0, %s49
      %s51 = sphi 0, %s49
      %s52 = sphi 0, %s51
      %s66 = sphi 0, %s52
      %s70 = sphi 0, %s70
      %s72 = sphi 0, %s70
      %s73 = sphi 0, %s72
      %s87 = sphi 0, %s73
      %s91 = sphi 0, %s91
      %s93 = sphi 0, %s91
      %s94 = sphi 0, %s93
      %s108 = sphi 0, %s94
      %s112 = sphi 0, %s112
      %s114 = sphi 0, %s112
      %s115 = sphi 0, %s114
      %s129 = sphi 0, %s115
      %s135 = sphi 0, %s137
      %s138 = sphi 0, %s135
      %s139 = sphi 0, %s138
      %s155 = sphi 0, %s139
    $region4: #{tpu_custom_call.1} parent=1 // loop_header_branch
      %18 = sbr.rel (%p16) target = $region8
    $region5: #{tpu_custom_call.1} parent=1 // loop_body
      %s20 = ssub.s32 %s15, 1
      %s21 = ssub.s32 %s15, 2
      %s22 = sadd.s32 %s15, 1
      %s23 = ssub.s32 %s15, %s22
      %p24 = scmp.eq.s32.totalorder %s23, 0
      %s26 = sadd.s32 %s25, 1
      %s27 = scalar_select %p24, %s25, %s26
      %p30 = pneg %p24
      %p31 = scmp.eq.s32.totalorder %s15, 1
      %p32 = por %p30, %p31
      %p33 = scmp.ne.s32.totalorder %s25, %s28
      %p34 = scmp.eq.s32.totalorder %s15, 0
      %p35 = por %p33, %p34
      %p36 = scmp.ne.s32.totalorder %s25, %s28
      %p37 = scmp.eq.s32.totalorder %s20, 1
      %p38 = por %p36, %p37
      %p39 = scmp.ne.s32.totalorder %s28, %s29
      %p40 = scmp.eq.s32.totalorder %s20, 0
      %p41 = por %p39, %p40
      %p42 = scmp.ne.s32.totalorder %s28, %s29
      %p43 = scmp.eq.s32.totalorder %s21, 1
      %p44 = por %p42, %p43
      %p46 = scmp.ne.s32.totalorder %s29, %s45
      %p47 = scmp.eq.s32.totalorder %s21, 0
      %p48 = por %p46, %p47
      %s50 = sadd.s32 %s49, 1
      %p53 = scmp.eq.s32.totalorder %s15, 1
      %p54 = scmp.ne.s32.totalorder %s49, %s51
      %p55 = scmp.eq.s32.totalorder %s15, 0
      %p56 = por %p54, %p55
      %p57 = scmp.ne.s32.totalorder %s49, %s51
      %p58 = scmp.eq.s32.totalorder %s20, 1
      %p59 = por %p57, %p58
      %p60 = scmp.ne.s32.totalorder %s51, %s52
      %p61 = scmp.eq.s32.totalorder %s20, 0
      %p62 = por %p60, %p61
      %p63 = scmp.ne.s32.totalorder %s51, %s52
      %p64 = scmp.eq.s32.totalorder %s21, 1
      %p65 = por %p63, %p64
      %p67 = scmp.ne.s32.totalorder %s52, %s66
      %p68 = scmp.eq.s32.totalorder %s21, 0
      %p69 = por %p67, %p68
      %s71 = sadd.s32 %s70, 1
      %p74 = scmp.eq.s32.totalorder %s15, 1
      %p75 = scmp.ne.s32.totalorder %s70, %s72
      %p76 = scmp.eq.s32.totalorder %s15, 0
      %p77 = por %p75, %p76
      %p78 = scmp.ne.s32.totalorder %s70, %s72
      %p79 = scmp.eq.s32.totalorder %s20, 1
      %p80 = por %p78, %p79
      %p81 = scmp.ne.s32.totalorder %s72, %s73
      %p82 = scmp.eq.s32.totalorder %s20, 0
      %p83 = por %p81, %p82
      %p84 = scmp.ne.s32.totalorder %s72, %s73
      %p85 = scmp.eq.s32.totalorder %s21, 1
      %p86 = por %p84, %p85
      %p88 = scmp.ne.s32.totalorder %s73, %s87
      %p89 = scmp.eq.s32.totalorder %s21, 0
      %p90 = por %p88, %p89
      %s92 = sadd.s32 %s91, 1
      %p95 = scmp.eq.s32.totalorder %s15, 1
      %p96 = scmp.ne.s32.totalorder %s91, %s93
      %p97 = scmp.eq.s32.totalorder %s15, 0
      %p98 = por %p96, %p97
      %p99 = scmp.ne.s32.totalorder %s91, %s93
      %p100 = scmp.eq.s32.totalorder %s20, 1
      %p101 = por %p99, %p100
      %p102 = scmp.ne.s32.totalorder %s93, %s94
      %p103 = scmp.eq.s32.totalorder %s20, 0
      %p104 = por %p102, %p103
      %p105 = scmp.ne.s32.totalorder %s93, %s94
      %p106 = scmp.eq.s32.totalorder %s21, 1
      %p107 = por %p105, %p106
      %p109 = scmp.ne.s32.totalorder %s94, %s108
      %p110 = scmp.eq.s32.totalorder %s21, 0
      %p111 = por %p109, %p110
      %s113 = sadd.s32 %s112, 1
      %p116 = scmp.eq.s32.totalorder %s15, 1
      %p117 = scmp.ne.s32.totalorder %s112, %s114
      %p118 = scmp.eq.s32.totalorder %s15, 0
      %p119 = por %p117, %p118
      %p120 = scmp.ne.s32.totalorder %s112, %s114
      %p121 = scmp.eq.s32.totalorder %s20, 1
      %p122 = por %p120, %p121
      %p123 = scmp.ne.s32.totalorder %s114, %s115
      %p124 = scmp.eq.s32.totalorder %s20, 0
      %p125 = por %p123, %p124
      %p126 = scmp.ne.s32.totalorder %s114, %s115
      %p127 = scmp.eq.s32.totalorder %s21, 1
      %p128 = por %p126, %p127
      %p130 = scmp.ne.s32.totalorder %s115, %s129
      %p131 = scmp.eq.s32.totalorder %s21, 0
      %p132 = por %p130, %p131
      %s133 = ssub.s32 %s15, %s22
      %p134 = scmp.eq.s32.totalorder %s133, 0
      %s136 = sadd.s32 %s135, 1
      %s137 = scalar_select %p134, %s135, %s136
      %p140 = pneg %p134
      %p141 = scmp.eq.s32.totalorder %s15, 1
      %p142 = por %p140, %p141
      %p143 = scmp.ne.s32.totalorder %s135, %s138
      %p144 = scmp.eq.s32.totalorder %s15, 0
      %p145 = por %p143, %p144
      %p146 = scmp.ne.s32.totalorder %s135, %s138
      %p147 = scmp.eq.s32.totalorder %s20, 1
      %p148 = por %p146, %p147
      %p149 = scmp.ne.s32.totalorder %s138, %s139
      %p150 = scmp.eq.s32.totalorder %s20, 0
      %p151 = por %p149, %p150
      %p152 = scmp.ne.s32.totalorder %s138, %s139
      %p153 = scmp.eq.s32.totalorder %s21, 1
      %p154 = por %p152, %p153
      %p156 = scmp.ne.s32.totalorder %s139, %s155
      %p157 = scmp.eq.s32.totalorder %s21, 0
      %p158 = por %p156, %p157
      %p159 = scmp.le.s32.totalorder 1, %s15
      %p160 = scmp.lt.s32.totalorder %s15, 3
      %p161 = pnand %p159, %p160
      %p162 = pneg %p161
      // Predicated region
      $region9: #{tpu_custom_call.1} parent=5 // pred_check
        _
      $region10: #{tpu_custom_call.1} parent=5 // pred_check_branch
        %164 = sbr.rel (%p161) target = $region12
      $region11: #{tpu_custom_call.1} parent=5 // pred_region
        %s165 = ssub.s32 %s15, 1
        // Predicated region
        $region13: #{tpu_custom_call.1} parent=11 // pred_check
          %p166 = pneg %p62
        $region14: #{tpu_custom_call.1} parent=11 // pred_check_branch
          %168 = sbr.rel (%p166) target = $region16
        $region15: #{tpu_custom_call.1} parent=11 // pred_region
          _
        $region16: #{tpu_custom_call.1} parent=11 // pred_fallthru
          _
        // Predicated region
        $region17: #{tpu_custom_call.1} parent=11 // pred_check
          %p169 = pneg %p83
        $region18: #{tpu_custom_call.1} parent=11 // pred_check_branch
          %171 = sbr.rel (%p169) target = $region20
        $region19: #{tpu_custom_call.1} parent=11 // pred_region
          _
        $region20: #{tpu_custom_call.1} parent=11 // pred_fallthru
          _
        // Predicated region
        $region21: #{tpu_custom_call.1} parent=11 // pred_check
          %p172 = pneg %p104
        $region22: #{tpu_custom_call.1} parent=11 // pred_check_branch
          %174 = sbr.rel (%p172) target = $region24
        $region23: #{tpu_custom_call.1} parent=11 // pred_region
          %s176 = ssub.s32 16384, 16384
          %177 = vsyncadd [#allocation3], %s176
          %s178 = sshll.u32 [#allocation2], 4
          %s179 = int_to_ptr.vmem [resolvable:$true] %s178
          %184 = dma.hbm_to_vmem [thread:$0]  %s3, 16384, %s179, [#allocation3], 512, 512, 32
        $region24: #{tpu_custom_call.1} parent=11 // pred_fallthru
          _
        // Predicated region
        $region25: #{tpu_custom_call.1} parent=11 // pred_check
          %p185 = pneg %p125
        $region26: #{tpu_custom_call.1} parent=11 // pred_check_branch
          %187 = sbr.rel (%p185) target = $region28
        $region27: #{tpu_custom_call.1} parent=11 // pred_region
          _
        $region28: #{tpu_custom_call.1} parent=11 // pred_fallthru
          _
      $region12: #{tpu_custom_call.1} parent=5 // pred_fallthru
        _
      %p188 = scmp.lt.s32.totalorder %s15, 2
      // Predicated region
      $region29: #{tpu_custom_call.1} parent=5 // pred_check
        %p189 = pneg %p188
      $region30: #{tpu_custom_call.1} parent=5 // pred_check_branch
        %191 = sbr.rel (%p189) target = $region32
      $region31: #{tpu_custom_call.1} parent=5 // pred_region
        // Predicated region
        $region33: #{tpu_custom_call.1} parent=31 // pred_check
          %p192 = pneg %p35
        $region34: #{tpu_custom_call.1} parent=31 // pred_check_branch
          %194 = sbr.rel (%p192) target = $region36
        $region35: #{tpu_custom_call.1} parent=31 // pred_region
          %p195 = scmp.lt.s32.totalorder %s15, 1
          %s196 = scalar_select %p195, %s15, 1
          %s197 = smul.addr %s196, 9
          %s198 = smul.addr %s197, 8
          %s199 = scalar_lea.vmem %s0, %s198
        $region36: #{tpu_custom_call.1} parent=31 // pred_fallthru
          _
      $region32: #{tpu_custom_call.1} parent=5 // pred_fallthru
        _
      %p200 = scmp.le.s32.totalorder 1, %s15
      %p201 = scmp.lt.s32.totalorder %s15, 3
      %p202 = pnand %p200, %p201
      %p203 = pneg %p202
      // Predicated region
      $region37: #{tpu_custom_call.1} parent=5 // pred_check
        _
      $region38: #{tpu_custom_call.1} parent=5 // pred_check_branch
        %205 = sbr.rel (%p202) target = $region40
      $region39: #{tpu_custom_call.1} parent=5 // pred_region
        %s206 = ssub.s32 %s15, 1
        // Predicated region
        $region41: #{tpu_custom_call.1} parent=39 // pred_check
          %p207 = pneg %p104
        $region42: #{tpu_custom_call.1} parent=39 // pred_check_branch
          %209 = sbr.rel (%p207) target = $region44
        $region43: #{tpu_custom_call.1} parent=39 // pred_region
          %210 = dma.done [#allocation3], 16384
        $region44: #{tpu_custom_call.1} parent=39 // pred_fallthru
          _
        %p211 = scmp.lt.s32.totalorder %s20, 1
        %s212 = scalar_select %p211, %s20, 1
        %s213 = smul.addr %s212, 9
        %s214 = smul.addr %s213, 8
        %s215 = scalar_lea.vmem %s0, %s214
        %p216 = pneg %p41
        %p217 = pneg %p38
        %p218 = pneg %p62
        %p219 = pneg %p59
        %p220 = pneg %p83
        %p221 = pneg %p80
        %p222 = pneg %p104
        %p223 = pneg %p101
        %p224 = pneg %p125
        %p225 = pneg %p122
        %p226 = pneg %p151
        %p227 = pneg %p148
        %s228 = sand.u32 %s138, 1
        %s229 = scalar_lea.sflag [#allocation4], %s228
        %s230 = sand.u32 %s138, 1
        %s231 = smul.addr %s230, 64
        %s232 = scalar_lea.vmem [#allocation5], %s231
        %p233 = scmp.lt.s32.totalorder %s20, 1
        %s234 = scalar_select %p233, %s20, 1
        %s235 = smul.addr %s234, 9
        %s236 = smul.addr %s235, 8
        %s237 = scalar_lea.vmem %s0, %s236
        %v238 = vld [vmem:[%s1] sm:$0xff]
        %v239 = vld [vmem:[%s1 + $0x8] sm:$0xff]
        %v240 = vld [vmem:[%s1 + $0x10] sm:$0x1]
        %v241 = vld [vmem:[%s1 + $0x18] sm:$0x1]
        %v242 = vld [vmem:[%s2] sm:$0x3]
        %v243 = vld [vmem:[%s4] sm:$0xf]
        %v244 = vld [vmem:[%s237] sm:$0xff]
        %v245 = vld [vmem:[%s237 + $0x8] sm:$0xff]
        %v246 = vld [vmem:[%s237 + $0x10] sm:$0xff]
        %v247 = vld [vmem:[%s237 + $0x18] sm:$0xff]
        %v248 = vld [vmem:[%s237 + $0x20] sm:$0xff]
        %v249 = vld [vmem:[%s237 + $0x28] sm:$0xff]
        %v250 = vlaneseq
        %v251 = vshrl.u32 %v250, 7
        %v252 = vsub.s32 0, %v251
        %v253 = vrot.slane %v238, %v252
        %v254 = vlaneseq
        %v255 = vshrl.u32 %v254, 7
        %v256 = vsub.s32 0, %v255
        %v257 = vrot.slane %v239, %v256
        %v258 = vmul.f32 %v244, %v253
        %v259 = vmul.f32 %v245, %v257
        %v260 = vmul.f32 %v247, %v253
        %v261 = vmul.f32 %v248, %v257
        %v262 = vadd.f32 %v258, 0.0
        %v263 = vadd.f32 %v259, 0.0
        %v264 = vadd.f32 %v260, 0.0
        %v265 = vadd.f32 %v261, 0.0
        %v266 = vlaneseq
        %v267 = vshrl.u32 %v266, 7
        %v268 = vsub.s32 1, %v267
        %v269 = vrot.slane %v238, %v268
        %v270 = vlaneseq
        %v271 = vshrl.u32 %v270, 7
        %v272 = vsub.s32 1, %v271
        %v273 = vrot.slane %v239, %v272
        %276 = vrot.lane.b32.xlu0 %v269, 16
        %v277 = vpop.permute.xlu0 %276
        %278 = vrot.lane.b32.xlu0 %v273, 16
        %v279 = vpop.permute.xlu0 %278
        %vm280 = vcmask 130048
        %v281 = vsel %vm280, %v277, %v279
        %v285 = vmul.f32 %v244, %v277
        %v286 = vmul.f32 %v245, %v281
        %v287 = vmul.f32 %v246, %v279
        %v288 = vmul.f32 %v247, %v277
        %v289 = vmul.f32 %v248, %v281
        %v290 = vmul.f32 %v249, %v279
        %297 = vrot.lane.b32.xlu0 %v285, 112
        %v298 = vpop.permute.xlu0 %297
        %299 = vrot.lane.b32.xlu0 %v286, 112
        %v300 = vpop.permute.xlu0 %299
        %301 = vrot.lane.b32.xlu0 %v287, 112
        %v302 = vpop.permute.xlu0 %301
        %303 = vrot.lane.b32.xlu0 %v288, 112
        %v304 = vpop.permute.xlu0 %303
        %305 = vrot.lane.b32.xlu0 %v289, 112
        %v306 = vpop.permute.xlu0 %305
        %307 = vrot.lane.b32.xlu0 %v290, 112
        %v308 = vpop.permute.xlu0 %307
        %vm309 = vcmask 916480
        %v310 = vsel %vm309, %v298, %v300
        %v311 = vsel %vm309, %v300, %v302
        %v312 = vsel %vm309, %v304, %v306
        %v313 = vsel %vm309, %v306, %v308
        %v318 = vadd.f32 %v262, %v310
        %v319 = vadd.f32 %v263, %v311
        %v320 = vadd.f32 %v264, %v312
        %v321 = vadd.f32 %v265, %v313
        %v322 = vlaneseq
        %v323 = vshrl.u32 %v322, 7
        %v324 = vsub.s32 2, %v323
        %v325 = vrot.slane %v238, %v324
        %v326 = vlaneseq
        %v327 = vshrl.u32 %v326, 7
        %v328 = vsub.s32 2, %v327
        %v329 = vrot.slane %v239, %v328
        %332 = vrot.lane.b32.xlu0 %v325, 32
        %v333 = vpop.permute.xlu0 %332
        %334 = vrot.lane.b32.xlu0 %v329, 32
        %v335 = vpop.permute.xlu0 %334
        %vm336 = vcmask 261120
        %v337 = vsel %vm336, %v333, %v335
        %v341 = vmul.f32 %v244, %v333
        %v342 = vmul.f32 %v245, %v337
        %v343 = vmul.f32 %v246, %v335
        %v344 = vmul.f32 %v247, %v333
        %v345 = vmul.f32 %v248, %v337
        %v346 = vmul.f32 %v249, %v335
        %353 = vrot.lane.b32.xlu0 %v341, 96
        %v354 = vpop.permute.xlu0 %353
        %355 = vrot.lane.b32.xlu0 %v342, 96
        %v356 = vpop.permute.xlu0 %355
        %357 = vrot.lane.b32.xlu0 %v343, 96
        %v358 = vpop.permute.xlu0 %357
        %359 = vrot.lane.b32.xlu0 %v344, 96
        %v360 = vpop.permute.xlu0 %359
        %361 = vrot.lane.b32.xlu0 %v345, 96
        %v362 = vpop.permute.xlu0 %361
        %363 = vrot.lane.b32.xlu0 %v346, 96
        %v364 = vpop.permute.xlu0 %363
        %vm365 = vcmask 785408
        %v366 = vsel %vm365, %v354, %v356
        %v367 = vsel %vm365, %v356, %v358
        %v368 = vsel %vm365, %v360, %v362
        %v369 = vsel %vm365, %v362, %v364
        %v374 = vadd.f32 %v318, %v366
        %v375 = vadd.f32 %v319, %v367
        %v376 = vadd.f32 %v320, %v368
        %v377 = vadd.f32 %v321, %v369
        %v378 = vld [vmem:[%s237] sm:$0xfe]
        %v379 = vld [vmem:[%s237 + $0x8] sm:$0xfe]
        %v380 = vld [vmem:[%s237 + $0x10] sm:$0xfe]
        %v381 = vld [vmem:[%s237 + $0x30] sm:$0x1]
        %v382 = vld [vmem:[%s237 + $0x38] sm:$0x1]
        %v383 = vld [vmem:[%s237 + $0x40] sm:$0x1]
        %v384 = vlaneseq
        %v385 = vshrl.u32 %v384, 7
        %v386 = vsub.s32 3, %v385
        %v387 = vrot.slane %v238, %v386
        %v388 = vlaneseq
        %v389 = vshrl.u32 %v388, 7
        %v390 = vsub.s32 3, %v389
        %v391 = vrot.slane %v239, %v390
        %v392 = vmul.f32 %v378, %v387
        %v393 = vmul.f32 %v379, %v391
        %v394 = vmul.f32 %v247, %v387
        %v395 = vmul.f32 %v248, %v391
        %v396 = vmul.f32 %v381, %v387
        %v397 = vmul.f32 %v382, %v391
        %vm404 = vcmask 1046528
        %v405 = vrot.slane %v392, 1
        %v406 = vrot.slane %v394, 1
        %v407 = vsel %vm404, %v405, %v406
        %v408 = vrot.slane %v393, 1
        %v409 = vrot.slane %v395, 1
        %v410 = vsel %vm404, %v408, %v409
        %v411 = vrot.slane %v396, 1
        %v412 = vsel %vm404, %v406, %v411
        %v413 = vrot.slane %v397, 1
        %v414 = vsel %vm404, %v409, %v413
        %v419 = vadd.f32 %v374, %v407
        %v420 = vadd.f32 %v375, %v410
        %v421 = vadd.f32 %v376, %v412
        %v422 = vadd.f32 %v377, %v414
        %v423 = vlaneseq
        %v424 = vshrl.u32 %v423, 7
        %v425 = vsub.s32 4, %v424
        %v426 = vrot.slane %v238, %v425
        %v427 = vlaneseq
        %v428 = vshrl.u32 %v427, 7
        %v429 = vsub.s32 4, %v428
        %v430 = vrot.slane %v239, %v429
        %433 = vrot.lane.b32.xlu0 %v426, 16
        %v434 = vpop.permute.xlu0 %433
        %435 = vrot.lane.b32.xlu0 %v430, 16
        %v436 = vpop.permute.xlu0 %435
        %v437 = vsel %vm280, %v434, %v436
        %v441 = vmul.f32 %v378, %v434
        %v442 = vmul.f32 %v379, %v437
        %v443 = vmul.f32 %v380, %v436
        %v444 = vmul.f32 %v247, %v434
        %v445 = vmul.f32 %v248, %v437
        %v446 = vmul.f32 %v249, %v436
        %v447 = vmul.f32 %v381, %v434
        %v448 = vmul.f32 %v382, %v437
        %v449 = vmul.f32 %v383, %v436
        %v459 = vrot.slane %v441, 1
        %v460 = vrot.slane %v444, 1
        %v461 = vsel %vm404, %v459, %v460
        %v462 = vrot.slane %v442, 1
        %v463 = vrot.slane %v445, 1
        %v464 = vsel %vm404, %v462, %v463
        %v465 = vrot.slane %v443, 1
        %v466 = vrot.slane %v446, 1
        %v467 = vsel %vm404, %v465, %v466
        %v468 = vrot.slane %v447, 1
        %v469 = vsel %vm404, %v460, %v468
        %v470 = vrot.slane %v448, 1
        %v471 = vsel %vm404, %v463, %v470
        %v472 = vrot.slane %v449, 1
        %v473 = vsel %vm404, %v466, %v472
        %474 = vrot.lane.b32.xlu0 %v461, 112
        %v475 = vpop.permute.xlu0 %474
        %476 = vrot.lane.b32.xlu0 %v464, 112
        %v477 = vpop.permute.xlu0 %476
        %478 = vrot.lane.b32.xlu0 %v467, 112
        %v479 = vpop.permute.xlu0 %478
        %480 = vrot.lane.b32.xlu0 %v469, 112
        %v481 = vpop.permute.xlu0 %480
        %482 = vrot.lane.b32.xlu0 %v471, 112
        %v483 = vpop.permute.xlu0 %482
        %484 = vrot.lane.b32.xlu0 %v473, 112
        %v485 = vpop.permute.xlu0 %484
        %v486 = vsel %vm309, %v475, %v477
        %v487 = vsel %vm309, %v477, %v479
        %v488 = vsel %vm309, %v481, %v483
        %v489 = vsel %vm309, %v483, %v485
        %v494 = vadd.f32 %v419, %v486
        %v495 = vadd.f32 %v420, %v487
        %v496 = vadd.f32 %v421, %v488
        %v497 = vadd.f32 %v422, %v489
        %v498 = vlaneseq
        %v499 = vshrl.u32 %v498, 7
        %v500 = vsub.s32 5, %v499
        %v501 = vrot.slane %v238, %v500
        %v502 = vlaneseq
        %v503 = vshrl.u32 %v502, 7
        %v504 = vsub.s32 5, %v503
        %v505 = vrot.slane %v239, %v504
        %508 = vrot.lane.b32.xlu0 %v501, 32
        %v509 = vpop.permute.xlu0 %508
        %510 = vrot.lane.b32.xlu0 %v505, 32
        %v511 = vpop.permute.xlu0 %510
        %v512 = vsel %vm336, %v509, %v511
        %v516 = vmul.f32 %v378, %v509
        %v517 = vmul.f32 %v379, %v512
        %v518 = vmul.f32 %v380, %v511
        %v519 = vmul.f32 %v247, %v509
        %v520 = vmul.f32 %v248, %v512
        %v521 = vmul.f32 %v249, %v511
        %v522 = vmul.f32 %v381, %v509
        %v523 = vmul.f32 %v382, %v512
        %v524 = vmul.f32 %v383, %v511
        %v534 = vrot.slane %v516, 1
        %v535 = vrot.slane %v519, 1
        %v536 = vsel %vm404, %v534, %v535
        %v537 = vrot.slane %v517, 1
        %v538 = vrot.slane %v520, 1
        %v539 = vsel %vm404, %v537, %v538
        %v540 = vrot.slane %v518, 1
        %v541 = vrot.slane %v521, 1
        %v542 = vsel %vm404, %v540, %v541
        %v543 = vrot.slane %v522, 1
        %v544 = vsel %vm404, %v535, %v543
        %v545 = vrot.slane %v523, 1
        %v546 = vsel %vm404, %v538, %v545
        %v547 = vrot.slane %v524, 1
        %v548 = vsel %vm404, %v541, %v547
        %549 = vrot.lane.b32.xlu0 %v536, 96
        %v550 = vpop.permute.xlu0 %549
        %551 = vrot.lane.b32.xlu0 %v539, 96
        %v552 = vpop.permute.xlu0 %551
        %553 = vrot.lane.b32.xlu0 %v542, 96
        %v554 = vpop.permute.xlu0 %553
        %555 = vrot.lane.b32.xlu0 %v544, 96
        %v556 = vpop.permute.xlu0 %555
        %557 = vrot.lane.b32.xlu0 %v546, 96
        %v558 = vpop.permute.xlu0 %557
        %559 = vrot.lane.b32.xlu0 %v548, 96
        %v560 = vpop.permute.xlu0 %559
        %v561 = vsel %vm365, %v550, %v552
        %v562 = vsel %vm365, %v552, %v554
        %v563 = vsel %vm365, %v556, %v558
        %v564 = vsel %vm365, %v558, %v560
        %v569 = vadd.f32 %v494, %v561
        %v570 = vadd.f32 %v495, %v562
        %v571 = vadd.f32 %v496, %v563
        %v572 = vadd.f32 %v497, %v564
        %v573 = vld [vmem:[%s237] sm:$0xfc]
        %v574 = vld [vmem:[%s237 + $0x8] sm:$0xfc]
        %v575 = vld [vmem:[%s237 + $0x10] sm:$0xfc]
        %v576 = vld [vmem:[%s237 + $0x30] sm:$0x3]
        %v577 = vld [vmem:[%s237 + $0x38] sm:$0x3]
        %v578 = vld [vmem:[%s237 + $0x40] sm:$0x3]
        %v579 = vlaneseq
        %v580 = vshrl.u32 %v579, 7
        %v581 = vsub.s32 6, %v580
        %v582 = vrot.slane %v238, %v581
        %v583 = vlaneseq
        %v584 = vshrl.u32 %v583, 7
        %v585 = vsub.s32 6, %v584
        %v586 = vrot.slane %v239, %v585
        %v587 = vmul.f32 %v573, %v582
        %v588 = vmul.f32 %v574, %v586
        %v589 = vmul.f32 %v247, %v582
        %v590 = vmul.f32 %v248, %v586
        %v591 = vmul.f32 %v576, %v582
        %v592 = vmul.f32 %v577, %v586
        %vm599 = vcmask 1045504
        %v600 = vrot.slane %v587, 2
        %v601 = vrot.slane %v589, 2
        %v602 = vsel %vm599, %v600, %v601
        %v603 = vrot.slane %v588, 2
        %v604 = vrot.slane %v590, 2
        %v605 = vsel %vm599, %v603, %v604
        %v606 = vrot.slane %v591, 2
        %v607 = vsel %vm599, %v601, %v606
        %v608 = vrot.slane %v592, 2
        %v609 = vsel %vm599, %v604, %v608
        %v614 = vadd.f32 %v569, %v602
        %v615 = vadd.f32 %v570, %v605
        %v616 = vadd.f32 %v571, %v607
        %v617 = vadd.f32 %v572, %v609
        %v618 = vlaneseq
        %v619 = vshrl.u32 %v618, 7
        %v620 = vsub.s32 7, %v619
        %v621 = vrot.slane %v238, %v620
        %v622 = vlaneseq
        %v623 = vshrl.u32 %v622, 7
        %v624 = vsub.s32 7, %v623
        %v625 = vrot.slane %v239, %v624
        %628 = vrot.lane.b32.xlu0 %v621, 16
        %v629 = vpop.permute.xlu0 %628
        %630 = vrot.lane.b32.xlu0 %v625, 16
        %v631 = vpop.permute.xlu0 %630
        %v632 = vsel %vm280, %v629, %v631
        %v636 = vmul.f32 %v573, %v629
        %v637 = vmul.f32 %v574, %v632
        %v638 = vmul.f32 %v575, %v631
        %v639 = vmul.f32 %v247, %v629
        %v640 = vmul.f32 %v248, %v632
        %v641 = vmul.f32 %v249, %v631
        %v642 = vmul.f32 %v576, %v629
        %v643 = vmul.f32 %v577, %v632
        %v644 = vmul.f32 %v578, %v631
        %v654 = vrot.slane %v636, 2
        %v655 = vrot.slane %v639, 2
        %v656 = vsel %vm599, %v654, %v655
        %v657 = vrot.slane %v637, 2
        %v658 = vrot.slane %v640, 2
        %v659 = vsel %vm599, %v657, %v658
        %v660 = vrot.slane %v638, 2
        %v661 = vrot.slane %v641, 2
        %v662 = vsel %vm599, %v660, %v661
        %v663 = vrot.slane %v642, 2
        %v664 = vsel %vm599, %v655, %v663
        %v665 = vrot.slane %v643, 2
        %v666 = vsel %vm599, %v658, %v665
        %v667 = vrot.slane %v644, 2
        %v668 = vsel %vm599, %v661, %v667
        %669 = vrot.lane.b32.xlu0 %v656, 112
        %v670 = vpop.permute.xlu0 %669
        %671 = vrot.lane.b32.xlu0 %v659, 112
        %v672 = vpop.permute.xlu0 %671
        %673 = vrot.lane.b32.xlu0 %v662, 112
        %v674 = vpop.permute.xlu0 %673
        %675 = vrot.lane.b32.xlu0 %v664, 112
        %v676 = vpop.permute.xlu0 %675
        %677 = vrot.lane.b32.xlu0 %v666, 112
        %v678 = vpop.permute.xlu0 %677
        %679 = vrot.lane.b32.xlu0 %v668, 112
        %v680 = vpop.permute.xlu0 %679
        %v681 = vsel %vm309, %v670, %v672
        %v682 = vsel %vm309, %v672, %v674
        %v683 = vsel %vm309, %v676, %v678
        %v684 = vsel %vm309, %v678, %v680
        %v689 = vadd.f32 %v614, %v681
        %v690 = vadd.f32 %v615, %v682
        %v691 = vadd.f32 %v616, %v683
        %v692 = vadd.f32 %v617, %v684
        %v693 = vlaneseq
        %v694 = vshrl.u32 %v693, 7
        %v695 = vsub.s32 0, %v694
        %v696 = vrot.slane %v240, %v695
        %v697 = vlaneseq
        %v698 = vshrl.u32 %v697, 7
        %v699 = vsub.s32 0, %v698
        %v700 = vrot.slane %v241, %v699
        %703 = vrot.lane.b32.xlu0 %v696, 32
        %v704 = vpop.permute.xlu0 %703
        %705 = vrot.lane.b32.xlu0 %v700, 32
        %v706 = vpop.permute.xlu0 %705
        %v707 = vsel %vm336, %v704, %v706
        %v711 = vmul.f32 %v573, %v704
        %v712 = vmul.f32 %v574, %v707
        %v713 = vmul.f32 %v575, %v706
        %v714 = vmul.f32 %v247, %v704
        %v715 = vmul.f32 %v248, %v707
        %v716 = vmul.f32 %v249, %v706
        %v717 = vmul.f32 %v576, %v704
        %v718 = vmul.f32 %v577, %v707
        %v719 = vmul.f32 %v578, %v706
        %v729 = vrot.slane %v711, 2
        %v730 = vrot.slane %v714, 2
        %v731 = vsel %vm599, %v729, %v730
        %v732 = vrot.slane %v712, 2
        %v733 = vrot.slane %v715, 2
        %v734 = vsel %vm599, %v732, %v733
        %v735 = vrot.slane %v713, 2
        %v736 = vrot.slane %v716, 2
        %v737 = vsel %vm599, %v735, %v736
        %v738 = vrot.slane %v717, 2
        %v739 = vsel %vm599, %v730, %v738
        %v740 = vrot.slane %v718, 2
        %v741 = vsel %vm599, %v733, %v740
        %v742 = vrot.slane %v719, 2
        %v743 = vsel %vm599, %v736, %v742
        %744 = vrot.lane.b32.xlu0 %v731, 96
        %v745 = vpop.permute.xlu0 %744
        %746 = vrot.lane.b32.xlu0 %v734, 96
        %v747 = vpop.permute.xlu0 %746
        %748 = vrot.lane.b32.xlu0 %v737, 96
        %v749 = vpop.permute.xlu0 %748
        %750 = vrot.lane.b32.xlu0 %v739, 96
        %v751 = vpop.permute.xlu0 %750
        %752 = vrot.lane.b32.xlu0 %v741, 96
        %v753 = vpop.permute.xlu0 %752
        %754 = vrot.lane.b32.xlu0 %v743, 96
        %v755 = vpop.permute.xlu0 %754
        %v756 = vsel %vm365, %v745, %v747
        %v757 = vsel %vm365, %v747, %v749
        %v758 = vsel %vm365, %v751, %v753
        %v759 = vsel %vm365, %v753, %v755
        %v764 = vadd.f32 %v689, %v756
        %v765 = vadd.f32 %v690, %v757
        %v766 = vadd.f32 %v691, %v758
        %v767 = vadd.f32 %v692, %v759
        %v769 = vlaneseq
        %v770 = vshrl.u32 %v769, 7
        %v771 = vsub.s32 0, %v770
        %v772 = vrot.slane %v242, %v771
        %v773 = vlaneseq
        %v774 = vshrl.u32 %v773, 7
        %v775 = vsub.s32 1, %v774
        %v776 = vrot.slane %v242, %v775
        %v779 = vadd.f32 %v764, %v772
        %v780 = vadd.f32 %v765, %v776
        %v781 = vadd.f32 %v766, %v772
        %v782 = vadd.f32 %v767, %v776
        %v783 = vmax.f32 %v779, 0.0
        %v784 = vmax.f32 %v780, 0.0
        %v785 = vmax.f32 %v781, 0.0
        %v786 = vmax.f32 %v782, 0.0
        %v787 = vld [vmem:[#allocation2] sm:$0xff]
        %v788 = vld [vmem:[#allocation2 + $0x8] sm:$0xff]
        %v789 = vld [vmem:[#allocation2 + $0x10] sm:$0xff]
        %v790 = vld [vmem:[#allocation2 + $0x18] sm:$0xff]
        %v791 = vld [vmem:[#allocation2 + $0x20] sm:$0xff]
        %v792 = vld [vmem:[#allocation2 + $0x28] sm:$0xff]
        %v793 = vld [vmem:[#allocation2 + $0x30] sm:$0xff]
        %v794 = vld [vmem:[#allocation2 + $0x38] sm:$0xff]
        %v795 = vld [vmem:[#allocation2 + $0x40] sm:$0xff]
        %v796 = vld [vmem:[#allocation2 + $0x48] sm:$0xff]
        %v797 = vld [vmem:[#allocation2 + $0x50] sm:$0xff]
        %v798 = vld [vmem:[#allocation2 + $0x58] sm:$0xff]
        %v799 = vld [vmem:[#allocation2 + $0x60] sm:$0xff]
        %v800 = vld [vmem:[#allocation2 + $0x68] sm:$0xff]
        %v801 = vld [vmem:[#allocation2 + $0x70] sm:$0xff]
        %v802 = vld [vmem:[#allocation2 + $0x78] sm:$0xff]
        %v803 = vld [vmem:[#allocation2 + $0x80] sm:$0xff]
        %v804 = vld [vmem:[#allocation2 + $0x88] sm:$0xff]
        %v805 = vld [vmem:[#allocation2 + $0x90] sm:$0xff]
        %v806 = vld [vmem:[#allocation2 + $0x98] sm:$0xff]
        %v807 = vld [vmem:[#allocation2 + $0xa0] sm:$0xff]
        %v808 = vld [vmem:[#allocation2 + $0xa8] sm:$0xff]
        %v809 = vld [vmem:[#allocation2 + $0xb0] sm:$0xff]
        %v810 = vld [vmem:[#allocation2 + $0xb8] sm:$0xff]
        %v811 = vld [vmem:[#allocation2 + $0xc0] sm:$0xff]
        %v812 = vld [vmem:[#allocation2 + $0xc8] sm:$0xff]
        %v813 = vld [vmem:[#allocation2 + $0xd0] sm:$0xff]
        %v814 = vld [vmem:[#allocation2 + $0xd8] sm:$0xff]
        %v815 = vld [vmem:[#allocation2 + $0xe0] sm:$0xff]
        %v816 = vld [vmem:[#allocation2 + $0xe8] sm:$0xff]
        %v817 = vld [vmem:[#allocation2 + $0xf0] sm:$0xff]
        %v818 = vld [vmem:[#allocation2 + $0xf8] sm:$0xff]
        %v819 = vld [vmem:[#allocation2 + $0x100] sm:$0xff]
        %v820 = vld [vmem:[#allocation2 + $0x108] sm:$0xff]
        %v821 = vld [vmem:[#allocation2 + $0x110] sm:$0xff]
        %v822 = vld [vmem:[#allocation2 + $0x118] sm:$0xff]
        %v823 = vld [vmem:[#allocation2 + $0x120] sm:$0xff]
        %v824 = vld [vmem:[#allocation2 + $0x128] sm:$0xff]
        %v825 = vld [vmem:[#allocation2 + $0x130] sm:$0xff]
        %v826 = vld [vmem:[#allocation2 + $0x138] sm:$0xff]
        %v827 = vld [vmem:[#allocation2 + $0x140] sm:$0xff]
        %v828 = vld [vmem:[#allocation2 + $0x148] sm:$0xff]
        %v829 = vld [vmem:[#allocation2 + $0x150] sm:$0xff]
        %v830 = vld [vmem:[#allocation2 + $0x158] sm:$0xff]
        %v831 = vld [vmem:[#allocation2 + $0x160] sm:$0xff]
        %v832 = vld [vmem:[#allocation2 + $0x168] sm:$0xff]
        %v833 = vld [vmem:[#allocation2 + $0x170] sm:$0xff]
        %v834 = vld [vmem:[#allocation2 + $0x178] sm:$0xff]
        %v835 = vld [vmem:[#allocation2 + $0x180] sm:$0xff]
        %v836 = vld [vmem:[#allocation2 + $0x188] sm:$0xff]
        %v837 = vld [vmem:[#allocation2 + $0x190] sm:$0xff]
        %v838 = vld [vmem:[#allocation2 + $0x198] sm:$0xff]
        %v839 = vld [vmem:[#allocation2 + $0x1a0] sm:$0xff]
        %v840 = vld [vmem:[#allocation2 + $0x1a8] sm:$0xff]
        %v841 = vld [vmem:[#allocation2 + $0x1b0] sm:$0xff]
        %v842 = vld [vmem:[#allocation2 + $0x1b8] sm:$0xff]
        %v843 = vld [vmem:[#allocation2 + $0x1c0] sm:$0xff]
        %v844 = vld [vmem:[#allocation2 + $0x1c8] sm:$0xff]
        %v845 = vld [vmem:[#allocation2 + $0x1d0] sm:$0xff]
        %v846 = vld [vmem:[#allocation2 + $0x1d8] sm:$0xff]
        %v847 = vld [vmem:[#allocation2 + $0x1e0] sm:$0xff]
        %v848 = vld [vmem:[#allocation2 + $0x1e8] sm:$0xff]
        %v849 = vld [vmem:[#allocation2 + $0x1f0] sm:$0xff]
        %v850 = vld [vmem:[#allocation2 + $0x1f8] sm:$0xff]
        %v851 = vld [vmem:[#allocation2 + $0x200] sm:$0xff]
        %v852 = vld [vmem:[#allocation2 + $0x208] sm:$0xff]
        %v853 = vld [vmem:[#allocation2 + $0x210] sm:$0xff]
        %v854 = vld [vmem:[#allocation2 + $0x218] sm:$0xff]
        %v855 = vld [vmem:[#allocation2 + $0x220] sm:$0xff]
        %v856 = vld [vmem:[#allocation2 + $0x228] sm:$0xff]
        %v857 = vld [vmem:[#allocation2 + $0x230] sm:$0xff]
        %v858 = vld [vmem:[#allocation2 + $0x238] sm:$0xff]
        %v859 = vld [vmem:[#allocation2 + $0x240] sm:$0xff]
        %v860 = vld [vmem:[#allocation2 + $0x248] sm:$0xff]
        %v861 = vld [vmem:[#allocation2 + $0x250] sm:$0xff]
        %v862 = vld [vmem:[#allocation2 + $0x258] sm:$0xff]
        %v863 = vld [vmem:[#allocation2 + $0x260] sm:$0xff]
        %v864 = vld [vmem:[#allocation2 + $0x268] sm:$0xff]
        %v865 = vld [vmem:[#allocation2 + $0x270] sm:$0xff]
        %v866 = vld [vmem:[#allocation2 + $0x278] sm:$0xff]
        %v867 = vld [vmem:[#allocation2 + $0x280] sm:$0xff]
        %v868 = vld [vmem:[#allocation2 + $0x288] sm:$0xff]
        %v869 = vld [vmem:[#allocation2 + $0x290] sm:$0xff]
        %v870 = vld [vmem:[#allocation2 + $0x298] sm:$0xff]
        %v871 = vld [vmem:[#allocation2 + $0x2a0] sm:$0xff]
        %v872 = vld [vmem:[#allocation2 + $0x2a8] sm:$0xff]
        %v873 = vld [vmem:[#allocation2 + $0x2b0] sm:$0xff]
        %v874 = vld [vmem:[#allocation2 + $0x2b8] sm:$0xff]
        %v875 = vld [vmem:[#allocation2 + $0x2c0] sm:$0xff]
        %v876 = vld [vmem:[#allocation2 + $0x2c8] sm:$0xff]
        %v877 = vld [vmem:[#allocation2 + $0x2d0] sm:$0xff]
        %v878 = vld [vmem:[#allocation2 + $0x2d8] sm:$0xff]
        %v879 = vld [vmem:[#allocation2 + $0x2e0] sm:$0xff]
        %v880 = vld [vmem:[#allocation2 + $0x2e8] sm:$0xff]
        %v881 = vld [vmem:[#allocation2 + $0x2f0] sm:$0xff]
        %v882 = vld [vmem:[#allocation2 + $0x2f8] sm:$0xff]
        %v883 = vld [vmem:[#allocation2 + $0x300] sm:$0xff]
        %v884 = vld [vmem:[#allocation2 + $0x308] sm:$0xff]
        %v885 = vld [vmem:[#allocation2 + $0x310] sm:$0xff]
        %v886 = vld [vmem:[#allocation2 + $0x318] sm:$0xff]
        %v887 = vld [vmem:[#allocation2 + $0x320] sm:$0xff]
        %v888 = vld [vmem:[#allocation2 + $0x328] sm:$0xff]
        %v889 = vld [vmem:[#allocation2 + $0x330] sm:$0xff]
        %v890 = vld [vmem:[#allocation2 + $0x338] sm:$0xff]
        %v891 = vld [vmem:[#allocation2 + $0x340] sm:$0xff]
        %v892 = vld [vmem:[#allocation2 + $0x348] sm:$0xff]
        %v893 = vld [vmem:[#allocation2 + $0x350] sm:$0xff]
        %v894 = vld [vmem:[#allocation2 + $0x358] sm:$0xff]
        %v895 = vld [vmem:[#allocation2 + $0x360] sm:$0xff]
        %v896 = vld [vmem:[#allocation2 + $0x368] sm:$0xff]
        %v897 = vld [vmem:[#allocation2 + $0x370] sm:$0xff]
        %v898 = vld [vmem:[#allocation2 + $0x378] sm:$0xff]
        %v899 = vld [vmem:[#allocation2 + $0x380] sm:$0xff]
        %v900 = vld [vmem:[#allocation2 + $0x388] sm:$0xff]
        %v901 = vld [vmem:[#allocation2 + $0x390] sm:$0xff]
        %v902 = vld [vmem:[#allocation2 + $0x398] sm:$0xff]
        %v903 = vld [vmem:[#allocation2 + $0x3a0] sm:$0xff]
        %v904 = vld [vmem:[#allocation2 + $0x3a8] sm:$0xff]
        %v905 = vld [vmem:[#allocation2 + $0x3b0] sm:$0xff]
        %v906 = vld [vmem:[#allocation2 + $0x3b8] sm:$0xff]
        %v907 = vld [vmem:[#allocation2 + $0x3c0] sm:$0xff]
        %v908 = vld [vmem:[#allocation2 + $0x3c8] sm:$0xff]
        %v909 = vld [vmem:[#allocation2 + $0x3d0] sm:$0xff]
        %v910 = vld [vmem:[#allocation2 + $0x3d8] sm:$0xff]
        %v911 = vld [vmem:[#allocation2 + $0x3e0] sm:$0xff]
        %v912 = vld [vmem:[#allocation2 + $0x3e8] sm:$0xff]
        %v913 = vld [vmem:[#allocation2 + $0x3f0] sm:$0xff]
        %v914 = vld [vmem:[#allocation2 + $0x3f8] sm:$0xff]
        %v916 = vlaneseq
        %v917 = vshrl.u32 %v916, 7
        %v918 = vsub.s32 0, %v917
        %v919 = vrot.slane %v243, %v918
        %v920 = vlaneseq
        %v921 = vshrl.u32 %v920, 7
        %v922 = vsub.s32 1, %v921
        %v923 = vrot.slane %v243, %v922
        %v924 = vlaneseq
        %v925 = vshrl.u32 %v924, 7
        %v926 = vsub.s32 2, %v925
        %v927 = vrot.slane %v243, %v926
        %v928 = vlaneseq
        %v929 = vshrl.u32 %v928, 7
        %v930 = vsub.s32 3, %v929
        %v931 = vrot.slane %v243, %v930
        %936 = vmatprep.subr.mxu0 %v788
        %937 = vmatpush1.msra.mxu0 %v787
        %938 = vmatprep.subr.mxu0 %v792
        %939 = vmatpush1.msra.mxu0 %v791
        %940 = vmatprep.subr.mxu0 %v796
        %941 = vmatpush1.msra.mxu0 %v795
        %942 = vmatprep.subr.mxu0 %v800
        %943 = vmatpush1.msra.mxu0 %v799
        %944 = vmatprep.subr.mxu0 %v804
        %945 = vmatpush1.msra.mxu0 %v803
        %946 = vmatprep.subr.mxu0 %v808
        %947 = vmatpush1.msra.mxu0 %v807
        %948 = vmatprep.subr.mxu0 %v812
        %949 = vmatpush1.msra.mxu0 %v811
        %950 = vmatprep.subr.mxu0 %v816
        %951 = vmatpush1.msra.mxu0 %v815
        %952 = vmatprep.subr.mxu0 %v820
        %953 = vmatpush1.msra.mxu0 %v819
        %954 = vmatprep.subr.mxu0 %v824
        %955 = vmatpush1.msra.mxu0 %v823
        %956 = vmatprep.subr.mxu0 %v828
        %957 = vmatpush1.msra.mxu0 %v827
        %958 = vmatprep.subr.mxu0 %v832
        %959 = vmatpush1.msra.mxu0 %v831
        %960 = vmatprep.subr.mxu0 %v836
        %961 = vmatpush1.msra.mxu0 %v835
        %962 = vmatprep.subr.mxu0 %v840
        %963 = vmatpush1.msra.mxu0 %v839
        %964 = vmatprep.subr.mxu0 %v844
        %965 = vmatpush1.msra.mxu0 %v843
        %966 = vmatprep.subr.mxu0 %v848
        %967 = vmatpush1.msra.mxu0 %v847
        %968 = vmatprep.subr.mxu0 %v852
        %969 = vmatpush1.msra.mxu0 %v851
        %970 = vmatprep.subr.mxu0 %v856
        %971 = vmatpush1.msra.mxu0 %v855
        %972 = vmatprep.subr.mxu0 %v860
        %973 = vmatpush1.msra.mxu0 %v859
        %974 = vmatprep.subr.mxu0 %v864
        %975 = vmatpush1.msra.mxu0 %v863
        %976 = vmatprep.subr.mxu0 %v868
        %977 = vmatpush1.msra.mxu0 %v867
        %978 = vmatprep.subr.mxu0 %v872
        %979 = vmatpush1.msra.mxu0 %v871
        %980 = vmatprep.subr.mxu0 %v876
        %981 = vmatpush1.msra.mxu0 %v875
        %982 = vmatprep.subr.mxu0 %v880
        %983 = vmatpush1.msra.mxu0 %v879
        %984 = vmatprep.subr.mxu0 %v884
        %985 = vmatpush1.msra.mxu0 %v883
        %986 = vmatprep.subr.mxu0 %v888
        %987 = vmatpush1.msra.mxu0 %v887
        %988 = vmatprep.subr.mxu0 %v892
        %989 = vmatpush1.msra.mxu0 %v891
        %990 = vmatprep.subr.mxu0 %v896
        %991 = vmatpush1.msra.mxu0 %v895
        %992 = vmatprep.subr.mxu0 %v900
        %993 = vmatpush1.msra.mxu0 %v899
        %994 = vmatprep.subr.mxu0 %v904
        %995 = vmatpush1.msra.mxu0 %v903
        %996 = vmatprep.subr.mxu0 %v908
        %997 = vmatpush1.msra.mxu0 %v907
        %998 = vmatprep.subr.mxu0 %v912
        %999 = vmatpush1.msra.mxu0 %v911
        %1000 = vmatprep.mubr.f32.mxu0 %v784
        %1001 = vmatmul.mubr.f32.gmra.mrb[0].mxu0 %v783
        %v1002 = vpop.f32.mrb[0].mxu0
        %v1003 = vadd.f32 %v919, %v1002
        %v1004 = vpop.f32.mrb[0].mxu0
        %v1005 = vadd.f32 %v923, %v1004
        %1006 = vmatprep.mubr.f32.mxu0 %v786
        %1007 = vmatmul.mubr.f32.gmra.mrb[0].mxu0 %v785
        %v1008 = vpop.f32.mrb[0].mxu0
        %v1009 = vadd.f32 %v919, %v1008
        %v1010 = vpop.f32.mrb[0].mxu0
        %v1011 = vadd.f32 %v923, %v1010
        %1012 = vdwg.mxu0
        %1013 = vmatprep.subr.mxu0 %v790
        %1014 = vmatpush1.msra.mxu0 %v789
        %1015 = vmatprep.subr.mxu0 %v794
        %1016 = vmatpush1.msra.mxu0 %v793
        %1017 = vmatprep.subr.mxu0 %v798
        %1018 = vmatpush1.msra.mxu0 %v797
        %1019 = vmatprep.subr.mxu0 %v802
        %1020 = vmatpush1.msra.mxu0 %v801
        %1021 = vmatprep.subr.mxu0 %v806
        %1022 = vmatpush1.msra.mxu0 %v805
        %1023 = vmatprep.subr.mxu0 %v810
        %1024 = vmatpush1.msra.mxu0 %v809
        %1025 = vmatprep.subr.mxu0 %v814
        %1026 = vmatpush1.msra.mxu0 %v813
        %1027 = vmatprep.subr.mxu0 %v818
        %1028 = vmatpush1.msra.mxu0 %v817
        %1029 = vmatprep.subr.mxu0 %v822
        %1030 = vmatpush1.msra.mxu0 %v821
        %1031 = vmatprep.subr.mxu0 %v826
        %1032 = vmatpush1.msra.mxu0 %v825
        %1033 = vmatprep.subr.mxu0 %v830
        %1034 = vmatpush1.msra.mxu0 %v829
        %1035 = vmatprep.subr.mxu0 %v834
        %1036 = vmatpush1.msra.mxu0 %v833
        %1037 = vmatprep.subr.mxu0 %v838
        %1038 = vmatpush1.msra.mxu0 %v837
        %1039 = vmatprep.subr.mxu0 %v842
        %1040 = vmatpush1.msra.mxu0 %v841
        %1041 = vmatprep.subr.mxu0 %v846
        %1042 = vmatpush1.msra.mxu0 %v845
        %1043 = vmatprep.subr.mxu0 %v850
        %1044 = vmatpush1.msra.mxu0 %v849
        %1045 = vmatprep.subr.mxu0 %v854
        %1046 = vmatpush1.msra.mxu0 %v853
        %1047 = vmatprep.subr.mxu0 %v858
        %1048 = vmatpush1.msra.mxu0 %v857
        %1049 = vmatprep.subr.mxu0 %v862
        %1050 = vmatpush1.msra.mxu0 %v861
        %1051 = vmatprep.subr.mxu0 %v866
        %1052 = vmatpush1.msra.mxu0 %v865
        %1053 = vmatprep.subr.mxu0 %v870
        %1054 = vmatpush1.msra.mxu0 %v869
        %1055 = vmatprep.subr.mxu0 %v874
        %1056 = vmatpush1.msra.mxu0 %v873
        %1057 = vmatprep.subr.mxu0 %v878
        %1058 = vmatpush1.msra.mxu0 %v877
        %1059 = vmatprep.subr.mxu0 %v882
        %1060 = vmatpush1.msra.mxu0 %v881
        %1061 = vmatprep.subr.mxu0 %v886
        %1062 = vmatpush1.msra.mxu0 %v885
        %1063 = vmatprep.subr.mxu0 %v890
        %1064 = vmatpush1.msra.mxu0 %v889
        %1065 = vmatprep.subr.mxu0 %v894
        %1066 = vmatpush1.msra.mxu0 %v893
        %1067 = vmatprep.subr.mxu0 %v898
        %1068 = vmatpush1.msra.mxu0 %v897
        %1069 = vmatprep.subr.mxu0 %v902
        %1070 = vmatpush1.msra.mxu0 %v901
        %1071 = vmatprep.subr.mxu0 %v906
        %1072 = vmatpush1.msra.mxu0 %v905
        %1073 = vmatprep.subr.mxu0 %v910
        %1074 = vmatpush1.msra.mxu0 %v909
        %1075 = vmatprep.subr.mxu0 %v914
        %1076 = vmatpush1.msra.mxu0 %v913
        %1077 = vmatprep.mubr.f32.mxu0 %v784
        %1078 = vmatmul.mubr.f32.gmra.mrb[0].mxu0 %v783
        %v1079 = vpop.f32.mrb[0].mxu0
        %v1080 = vadd.f32 %v927, %v1079
        %v1081 = vpop.f32.mrb[0].mxu0
        %v1082 = vadd.f32 %v931, %v1081
        %1083 = vmatprep.mubr.f32.mxu0 %v786
        %1084 = vmatmul.mubr.f32.gmra.mrb[0].mxu0 %v785
        %v1085 = vpop.f32.mrb[0].mxu0
        %v1086 = vadd.f32 %v927, %v1085
        %v1087 = vpop.f32.mrb[0].mxu0
        %v1088 = vadd.f32 %v931, %v1087
        %1089 = vdwg.mxu0
        %v1090 = vmax.f32 %v1003, 0.0
        %v1091 = vmax.f32 %v1005, 0.0
        %v1092 = vmax.f32 %v1080, 0.0
        %v1093 = vmax.f32 %v1082, 0.0
        %v1094 = vmax.f32 %v1009, 0.0
        %v1095 = vmax.f32 %v1011, 0.0
        %v1096 = vmax.f32 %v1086, 0.0
        %v1097 = vmax.f32 %v1088, 0.0
        %1098 = vst [vmem:[%s232] sm:$0xff] %v1090
        %1099 = vst [vmem:[%s232 + $0x8] sm:$0xff] %v1091
        %1100 = vst [vmem:[%s232 + $0x10] sm:$0xff] %v1092
        %1101 = vst [vmem:[%s232 + $0x18] sm:$0xff] %v1093
        %1102 = vst [vmem:[%s232 + $0x20] sm:$0xff] %v1094
        %1103 = vst [vmem:[%s232 + $0x28] sm:$0xff] %v1095
        %1104 = vst [vmem:[%s232 + $0x30] sm:$0xff] %v1096
        %1105 = vst [vmem:[%s232 + $0x38] sm:$0xff] %v1097
        %s1106 = sand.u32 %s138, 1
        %s1107 = scalar_lea.sflag [#allocation4], %s1106
        %s1108 = sand.u32 %s138, 1
        %s1109 = smul.addr %s1108, 64
        %s1110 = scalar_lea.vmem [#allocation5], %s1109
        // Predicated region
        $region45: #{tpu_custom_call.1} parent=39 // pred_check
          %p1111 = pneg %p148
        $region46: #{tpu_custom_call.1} parent=39 // pred_check_branch
          %1113 = sbr.rel (%p1111) target = $region48
        $region47: #{tpu_custom_call.1} parent=39 // pred_region
          %s1115 = ssub.s32 1024, 1024
          %1116 = vsyncadd %s1107, %s1115
          %s1117 = smul.addr %s20, 8
          %s1118 = smul.addr %s1117, 128
          %s1119 = scalar_lea.hbm %s5, %s1118
          %s1120 = sshll.u32 %s1110, 4
          %s1121 = int_to_ptr.vmem [resolvable:$true] %s1120
          %1126 = dma.vmem_to_hbm [thread:$0]  %s1121, 1024, %s1119, %s1107, 512, 512, 32
        $region48: #{tpu_custom_call.1} parent=39 // pred_fallthru
          _
      $region40: #{tpu_custom_call.1} parent=5 // pred_fallthru
        _
      %p1127 = scmp.le.s32.totalorder 2, %s15
      // Predicated region
      $region49: #{tpu_custom_call.1} parent=5 // pred_check
        %p1128 = pneg %p1127
      $region50: #{tpu_custom_call.1} parent=5 // pred_check_branch
        %1130 = sbr.rel (%p1128) target = $region52
      $region51: #{tpu_custom_call.1} parent=5 // pred_region
        %s1131 = ssub.s32 %s15, 2
        // Predicated region
        $region53: #{tpu_custom_call.1} parent=51 // pred_check
          %p1132 = pneg %p154
        $region54: #{tpu_custom_call.1} parent=51 // pred_check_branch
          %1134 = sbr.rel (%p1132) target = $region56
        $region55: #{tpu_custom_call.1} parent=51 // pred_region
          %s1135 = sand.u32 %s139, 1
          %s1136 = scalar_lea.sflag [#allocation4], %s1135
          %s1137 = sand.u32 %s139, 1
          %s1138 = smul.addr %s1137, 64
          %s1139 = scalar_lea.vmem [#allocation5], %s1138
          %1140 = dma.done %s1136, 1024
        $region56: #{tpu_custom_call.1} parent=51 // pred_fallthru
          _
      $region52: #{tpu_custom_call.1} parent=5 // pred_fallthru
        _
    $region6: #{tpu_custom_call.1} parent=1 // loop_footer
      %s19 = sadd.s32 1, %s15
    $region7: #{tpu_custom_call.1} parent=1 // loop_footer_branch
      %14 = sbr.rel target = $region3
    $region8: #{tpu_custom_call.1} parent=1 // loop_exit
      _
    %1141 = vsyncpa [#allocation3], 1
    %s1142 = scalar_lea.sflag [#allocation3], 1
    %1143 = vsyncpa %s1142, 1
    %1144 = vsyncpa [#allocation4], 1
    %s1145 = scalar_lea.sflag [#allocation4], 1
    %1146 = vsyncpa %s1145, 1

</llo_original>
